<compile_context>
chip_gen: v7x
topology: tpu7x:2x2x1
jax: 0.10.0
libtpu: 0.0.40
codegen_flags: <defaults>
</compile_context>

<pallas_src>
import functools

import jax
import jax.numpy as jnp
from jax.experimental import pallas as pl
from jax.experimental.pallas import tpu as pltpu

TM = 512                       # GEMM row tile (rows = pixels)
VMEM_LIMIT = 48 * 1024 * 1024  # fits v7x's 64 MiB physical VMEM with headroom


def _round_up(x, m):
    return ((x + m - 1) // m) * m


# ----------------------------------------------------------------------------
# Pallas kernels
# ----------------------------------------------------------------------------
def _mm_bias_kernel(a_ref, b_ref, bias_ref, o_ref, *, relu):
    """o = act(a @ b + bias); BN scale already folded into b's columns."""
    acc = jnp.dot(a_ref[...], b_ref[...], preferred_element_type=jnp.float32)
    acc = acc + bias_ref[...]
    if relu:
        acc = jnp.maximum(acc, 0.0)
    o_ref[...] = acc.astype(o_ref.dtype)


def _mm_bias_res_kernel(a_ref, b_ref, bias_ref, r_ref, o_ref, *, relu):
    """o = act(a @ b + bias + residual) — fused BasicBlock tail."""
    acc = jnp.dot(a_ref[...], b_ref[...], preferred_element_type=jnp.float32)
    acc = acc + bias_ref[...] + r_ref[...]
    if relu:
        acc = jnp.maximum(acc, 0.0)
    o_ref[...] = acc.astype(o_ref.dtype)


def matmul_bias_act(a, b, bias, *, scale=None, relu=False, residual=None):
    """GEMM with fused (BN-)scale/bias/residual/ReLU epilogue.

    a: (M, K) f32, b: (K, N) f32, bias/scale: (N,), residual: (M, N) f32 or None.
    bf16 inputs to the MXU, f32 accumulation, lane-dense (N padded to 128) out.
    """
    M, K = a.shape
    Kb, N = b.shape
    assert K == Kb
    if scale is not None:                       # fold BN scale into weights
        b = b * scale.reshape(1, N).astype(b.dtype)
    Np = _round_up(N, 128)
    if Np != N:
        b = jnp.pad(b, ((0, 0), (0, Np - N)))
        bias = jnp.pad(bias, (0, Np - N))
    a_bf = a.astype(jnp.bfloat16)
    b_bf = b.astype(jnp.bfloat16)
    bias2 = bias.reshape(1, Np).astype(jnp.float32)

    tm = min(TM, _round_up(M, 8))
    grid = (pl.cdiv(M, tm),)

    in_specs = [
        pl.BlockSpec((tm, K), lambda i: (i, 0)),
        pl.BlockSpec((K, Np), lambda i: (0, 0)),
        pl.BlockSpec((1, Np), lambda i: (0, 0)),
    ]
    args = [a_bf, b_bf, bias2]
    if residual is not None:
        res = residual.astype(jnp.float32)
        if Np != N:
            res = jnp.pad(res, ((0, 0), (0, Np - N)))
        in_specs.append(pl.BlockSpec((tm, Np), lambda i: (i, 0)))
        args.append(res)
        kern = functools.partial(_mm_bias_res_kernel, relu=relu)
    else:
        kern = functools.partial(_mm_bias_kernel, relu=relu)

    out = pl.pallas_call(
        kern,
        out_shape=jax.ShapeDtypeStruct((M, Np), jnp.float32),
        grid_spec=pltpu.PrefetchScalarGridSpec(
            num_scalar_prefetch=0,
            grid=grid,
            in_specs=in_specs,
            out_specs=pl.BlockSpec((tm, Np), lambda i: (i, 0)),
        ),
        compiler_params=pltpu.CompilerParams(
            dimension_semantics=("parallel",),
            vmem_limit_bytes=VMEM_LIMIT),
    )(*args)
    if Np != N:
        out = out[:, :N]
    return out


def _max_fuse_kernel(off_ref, rec_ref, feat_ref, o_ref, acc_ref):
    """Ragged max over agents of one batch (reduction over grid axis 2)."""
    l = pl.program_id(2)

    @pl.when(l == 0)
    def _():
        acc_ref[...] = feat_ref[...]

    @pl.when(l > 0)
    def _():
        acc_ref[...] = jnp.maximum(acc_ref[...], feat_ref[...])

    @pl.when(l == pl.num_programs(2) - 1)
    def _():
        o_ref[...] = acc_ref[...]


def max_fuse_ragged(feats, record_len):
    """feats: (sum_cav, P) f32, batches stored consecutively.
    Returns (B, P): per-batch max over that batch's record_len[b] agents.
    Rows are addressed through scalar-prefetched cumulative offsets; agents
    beyond record_len[b] re-read the last valid row (max unchanged)."""
    total, P = feats.shape
    B = len(record_len)
    Lred = max(max(record_len), 1)
    Pp = _round_up(P, 128)
    if Pp != P:
        feats = jnp.pad(feats, ((0, 0), (0, Pp - P)))
    feats3 = feats.reshape(total, 1, Pp)

    TP = 128
    for cand in (2048, 1024, 512, 256):
        if Pp % cand == 0:
            TP = cand
            break

    rec = jnp.asarray(record_len, dtype=jnp.int32)
    off = jnp.concatenate([jnp.zeros((1,), jnp.int32),
                           jnp.cumsum(rec)[:-1].astype(jnp.int32)])

    def feat_map(b, p, l, off_r, rec_r):
        row = off_r[b] + jnp.minimum(l, jnp.maximum(rec_r[b] - 1, 0))
        return (row, 0, p)

    out = pl.pallas_call(
        _max_fuse_kernel,
        out_shape=jax.ShapeDtypeStruct((B, 1, Pp), jnp.float32),
        grid_spec=pltpu.PrefetchScalarGridSpec(
            num_scalar_prefetch=2,
            grid=(B, Pp // TP, Lred),
            in_specs=[pl.BlockSpec((1, 1, TP), feat_map)],
            out_specs=pl.BlockSpec((1, 1, TP),
                                   lambda b, p, l, off_r, rec_r: (b, 0, p)),
            scratch_shapes=[pltpu.VMEM((1, 1, TP), jnp.float32)],
        ),
        compiler_params=pltpu.CompilerParams(
            dimension_semantics=("parallel", "parallel", "arbitrary")),
    )(off, rec, feats3)
    out = out.reshape(B, Pp)
    if Pp != P:
        out = out[:, :P]
    return out


# ----------------------------------------------------------------------------
# Conv / deconv helpers (im2col glue in JAX, fused GEMM in Pallas)
# ----------------------------------------------------------------------------
def conv2d_nhwc(x, w, bias, scale=None, stride=1, padding=0, relu=False,
                residual=None):
    """x: (N,H,W,Cin); w: PyTorch layout (Cout,Cin,kh,kw).
    Fused BN-scale/bias/residual/ReLU epilogue in the GEMM."""
    N, H, W, Cin = x.shape
    Cout, _, kh, kw = w.shape
    Ho = (H + 2 * padding - kh) // stride + 1
    Wo = (W + 2 * padding - kw) // stride + 1
    if kh == 1 and kw == 1 and padding == 0 and stride == 1:
        a = x.reshape(N * H * W, Cin)
    else:
        # TODO(synk): im2col is materialized in JAX; folding the (kh,kw) window
        # gather into the GEMM via a K-grid axis would cut activation HBM
        # traffic by ~kh*kw.
        xp = jnp.pad(x, ((0, 0), (padding, padding), (padding, padding), (0, 0)))
        cols = []
        for di in range(kh):
            for dj in range(kw):
                cols.append(xp[:, di:di + stride * Ho:stride,
                               dj:dj + stride * Wo:stride, :])
        a = jnp.concatenate(cols, axis=-1).reshape(N * Ho * Wo, kh * kw * Cin)
    bmat = jnp.transpose(w, (2, 3, 1, 0)).reshape(kh * kw * Cin, Cout)
    y = matmul_bias_act(a, bmat, bias, scale=scale, relu=relu, residual=residual)
    return y.reshape(N, Ho, Wo, Cout)


def deconv_bn_relu(x, w, scale, bias, stride):
    """ConvTranspose2d(Cin,Cout,k=s,stride=s,bias=False) + BN + ReLU.
    x: (N,H,W,Cin); w: PyTorch layout (Cin, Cout, s, s)."""
    N, H, W, Cin = x.shape
    _, Cout, s, _ = w.shape
    a = x.reshape(N * H * W, Cin)
    bmat = w.reshape(Cin, Cout * s * s)
    scale_cols = jnp.repeat(scale, s * s)
    bias_cols = jnp.repeat(bias, s * s)
    y = matmul_bias_act(a, bmat, bias_cols, scale=scale_cols, relu=True)
    y = y.reshape(N, H, W, Cout, s, s)
    # TODO(synk): pixel-shuffle transpose stays a JAX pass; could be folded
    # into the GEMM out_spec index_map to save one HBM round-trip.
    y = jnp.transpose(y, (0, 1, 4, 2, 5, 3)).reshape(N, H * s, W * s, Cout)
    return y


def basic_block(x, p):
    """BasicBlock: conv-bn-relu, conv-bn (+residual) fused into one GEMM epilogue."""
    out1 = conv2d_nhwc(x, p['w1'], p['b1'], scale=p['s1'],
                       stride=p['stride'], padding=1, relu=True)
    if 'wd' in p:
        identity = conv2d_nhwc(x, p['wd'], p['bd'], scale=p['sd'],
                               stride=p['stride'], padding=0, relu=False)
    else:
        identity = x
    N, Ho, Wo = out1.shape[0], out1.shape[1], out1.shape[2]
    C = p['w2'].shape[0]
    res2d = identity.reshape(N * Ho * Wo, C)
    return conv2d_nhwc(out1, p['w2'], p['b2'], scale=p['s2'],
                       stride=1, padding=1, relu=True, residual=res2d)


# ----------------------------------------------------------------------------
# warp_affine_simple (F.affine_grid + F.grid_sample, bilinear, zeros,
# align_corners=False)
# TODO(synk): the data-dependent 2-D bilinear gather of grid_sample stays in
#             plain JAX; it is not expressed as a tiled Pallas kernel here.
# ----------------------------------------------------------------------------
def warp_affine_simple_nhwc(src, M, out_hw):
    N, H, W, C = src.shape
    Ho, Wo = out_hw
    xs = (2.0 * jnp.arange(Wo, dtype=jnp.float32) + 1.0) / Wo - 1.0
    ys = (2.0 * jnp.arange(Ho, dtype=jnp.float32) + 1.0) / Ho - 1.0
    X = jnp.broadcast_to(xs[None, :], (Ho, Wo))
    Y = jnp.broadcast_to(ys[:, None], (Ho, Wo))
    gx = (M[:, 0, 0][:, None, None] * X + M[:, 0, 1][:, None, None] * Y
          + M[:, 0, 2][:, None, None])
    gy = (M[:, 1, 0][:, None, None] * X + M[:, 1, 1][:, None, None] * Y
          + M[:, 1, 2][:, None, None])
    ix = ((gx + 1.0) * W - 1.0) / 2.0
    iy = ((gy + 1.0) * H - 1.0) / 2.0
    x0 = jnp.floor(ix)
    y0 = jnp.floor(iy)
    x1 = x0 + 1.0
    y1 = y0 + 1.0
    wx1 = ix - x0
    wx0 = 1.0 - wx1
    wy1 = iy - y0
    wy0 = 1.0 - wy1
    flat = src.reshape(N, H * W, C)

    def gather(yi, xi):
        valid = ((xi >= 0) & (xi <= W - 1) & (yi >= 0) & (yi <= H - 1))
        xc = jnp.clip(xi, 0, W - 1).astype(jnp.int32)
        yc = jnp.clip(yi, 0, H - 1).astype(jnp.int32)
        idx = (yc * W + xc).reshape(N, Ho * Wo)
        vals = jnp.take_along_axis(flat, idx[:, :, None], axis=1)
        return vals.reshape(N, Ho, Wo, C), valid.astype(src.dtype)

    v00, m00 = gather(y0, x0)
    v01, m01 = gather(y0, x1)
    v10, m10 = gather(y1, x0)
    v11, m11 = gather(y1, x1)
    out = (v00 * (wy0 * wx0 * m00)[..., None] +
           v01 * (wy0 * wx1 * m01)[..., None] +
           v10 * (wy1 * wx0 * m10)[..., None] +
           v11 * (wy1 * wx1 * m11)[..., None])
    return out


def max_fusion(feat, record_len, t_norm):
    """MaxFusion.forward for one pyramid level (no padded regroup tensor).
    feat: (sum_cav, H, W, C); t_norm: (B, L, L, 2, 3)."""
    B = t_norm.shape[0]
    sum_cav, H, W, C = feat.shape
    idx_b, idx_j = [], []
    for b, n in enumerate(record_len):
        for j in range(n):
            idx_b.append(b)
            idx_j.append(j)
    # per-cav transform: cav j of batch b warps with t_norm[b, 0, j]
    M_cav = t_norm[jnp.asarray(idx_b), 0, jnp.asarray(idx_j)]   # (sum_cav, 2, 3)
    warped = warp_affine_simple_nhwc(feat, M_cav, (H, W))       # (sum_cav, H, W, C)
    fused = max_fuse_ragged(warped.reshape(sum_cav, H * W * C), record_len)
    return fused.reshape(B, H, W, C)


# ----------------------------------------------------------------------------
# Parameter init (deterministic, inference-mode BN folded into scale/bias)
# ----------------------------------------------------------------------------
def init_params(key, cfg):
    layer_nums = cfg['layer_nums']
    num_filters = cfg['num_filters']
    layer_strides = cfg['layer_strides']
    upsample_strides = cfg['upsample_strides']
    num_upsample_filters = cfg['num_upsample_filter']
    outC = cfg['outC']

    keys = iter(jax.random.split(key, 256))

    def conv_w(shape, scl=0.1):
        return scl * jax.random.normal(next(keys), shape, jnp.float32)

    def bn(c, eps):
        gamma = 1.0 + 0.1 * jax.random.normal(next(keys), (c,), jnp.float32)
        beta = 0.1 * jax.random.normal(next(keys), (c,), jnp.float32)
        mean = jnp.zeros((c,), jnp.float32)
        var = jnp.ones((c,), jnp.float32)
        s = gamma / jnp.sqrt(var + eps)
        b = beta - mean * s
        return s, b

    params = {'levels': [], 'deblocks': []}
    inplanes = num_filters[0]
    for lvl in range(len(layer_nums)):
        planes = num_filters[lvl]
        blocks = []
        for blk in range(layer_nums[lvl]):
            stride = layer_strides[lvl] if blk == 0 else 1
            p = {'stride': stride,
                 'w1': conv_w((planes, inplanes, 3, 3)),
                 'w2': conv_w((planes, planes, 3, 3))}
            p['s1'], p['b1'] = bn(planes, 1e-5)
            p['s2'], p['b2'] = bn(planes, 1e-5)
            if stride != 1 or inplanes != planes:
                p['wd'] = conv_w((planes, inplanes, 1, 1))
                p['sd'], p['bd'] = bn(planes, 1e-5)
            blocks.append(p)
            inplanes = planes
        params['levels'].append(blocks)

    for lvl in range(len(upsample_strides)):
        s = upsample_strides[lvl]
        cin, cout = num_filters[lvl], num_upsample_filters[lvl]
        d = {'stride': s, 'w': conv_w((cin, cout, s, s))}
        d['s'], d['b'] = bn(cout, 1e-3)
        params['deblocks'].append(d)

    cin_last = sum(num_upsample_filters)
    params['conv_last_w'] = conv_w((outC, cin_last, 3, 3))
    params['conv_last_b'] = 0.1 * jax.random.normal(next(keys), (outC,), jnp.float32)
    return params


# ----------------------------------------------------------------------------
# MSMaxFusion forward
# ----------------------------------------------------------------------------
def ms_max_fusion_forward(params, x_nchw, record_len, pairwise_t_matrix, cfg):
    sum_cav, C, H, W = x_nchw.shape
    B, L = pairwise_t_matrix.shape[:2]
    ds = cfg['downsample_rate'] * cfg['voxel_size'][0]

    # normalize (B,L,L,4,4) -> (B,L,L,2,3) affine matrices (as in forward())
    t = pairwise_t_matrix
    r00 = t[..., 0, 0]
    r01 = t[..., 0, 1] * H / W
    tx = t[..., 0, 3] / (ds * W) * 2.0
    r10 = t[..., 1, 0] * W / H
    r11 = t[..., 1, 1]
    ty = t[..., 1, 3] / (ds * H) * 2.0
    t_norm = jnp.stack([jnp.stack([r00, r01, tx], -1),
                        jnp.stack([r10, r11, ty], -1)], -2)  # (B,L,L,2,3)

    # ResNetModified backbone (BasicBlocks), NHWC internally
    feat = jnp.transpose(x_nchw, (0, 2, 3, 1)).astype(jnp.float32)
    level_feats = []
    for blocks in params['levels']:
        for p in blocks:
            feat = basic_block(feat, p)
        level_feats.append(feat)

    # per-level max fusion + deblocks
    ups = []
    for lvl, lf in enumerate(level_feats):
        fused = max_fusion(lf, record_len, t_norm)
        d = params['deblocks'][lvl]
        ups.append(deconv_bn_relu(fused, d['w'], d['s'], d['b'], d['stride']))

    xcat = jnp.concatenate(ups, axis=-1) if len(ups) > 1 else ups[0]

    out = conv2d_nhwc(xcat, params['conv_last_w'], params['conv_last_b'],
                      scale=None, stride=1, padding=1, relu=False)
    return jnp.transpose(out, (0, 3, 1, 2))  # back to NCHW


def make_pairwise(key, B, L):
    k1, k2 = jax.random.split(key)
    ang = 0.1 * jax.random.normal(k1, (B, L, L))
    trans = 2.0 * jax.random.normal(k2, (B, L, L, 2))
    c, s = jnp.cos(ang), jnp.sin(ang)
    m = jnp.zeros((B, L, L, 4, 4), jnp.float32)
    m = m.at[..., 0, 0].set(c)
    m = m.at[..., 0, 1].set(-s)
    m = m.at[..., 1, 0].set(s)
    m = m.at[..., 1, 1].set(c)
    m = m.at[..., 2, 2].set(1.0)
    m = m.at[..., 3, 3].set(1.0)
    m = m.at[..., 0, 3].set(trans[..., 0])
    m = m.at[..., 1, 3].set(trans[..., 1])
    return m


if __name__ == "__main__":
    cfg = dict(voxel_size=[0.4, 0.4, 4.0], downsample_rate=2, outC=8,
               layer_nums=[2, 2], num_filters=[8, 16], layer_strides=[1, 2],
               upsample_strides=[1, 2], num_upsample_filter=[8, 8])

    key = jax.random.PRNGKey(0)
    kx, kt, kp = jax.random.split(key, 3)

    record_len = [2, 1]         # B = 2 batches, 3 total cavs
    B, L = 2, 2
    C, H, W = cfg['num_filters'][0], 16, 16

    x = jax.random.normal(kx, (sum(record_len), C, H, W), jnp.float32)
    pairwise_t_matrix = make_pairwise(kt, B, L)
    params = init_params(kp, cfg)

    out = ms_max_fusion_forward(params, x, record_len, pairwise_t_matrix, cfg)
    out = jax.block_until_ready(out)
    assert out.shape == (B, cfg['outC'], H, W), out.shape
    assert bool(jnp.all(jnp.isfinite(out)))
    print("KERNEL_OK")
</pallas_src>

<mosaic_0001>
module attributes {stable_mosaic.version = 11 : i64} {
  func.func @_mm_bias_kernel(%arg0: i32, %arg1: memref<512x72xbf16, #tpu.memory_space<vmem>>, %arg2: memref<72x128xbf16, #tpu.memory_space<vmem>>, %arg3: memref<1x128xf32, #tpu.memory_space<vmem>>, %arg4: memref<512x128xf32, #tpu.memory_space<vmem>>) attributes {dimension_semantics = [#tpu.dimension_semantics<parallel>], iteration_bounds = array<i64: 2>, scalar_prefetch = 0 : i64, scratch_operands = 0 : i64, tpu.core_type = #tpu.core_type<tc>, window_params = [{transform_indices = @transform_0, window_bounds = array<i64: 512, 72>}, {pipeline_mode = #tpu.pipeline_mode<synchronous>, transform_indices = @transform_1, window_bounds = array<i64: 72, 128>}, {pipeline_mode = #tpu.pipeline_mode<synchronous>, transform_indices = @transform_2, window_bounds = array<i64: 1, 128>}, {transform_indices = @transform_3, window_bounds = array<i64: 512, 128>}]} {
    %c0 = arith.constant 0 : index
    %c0_0 = arith.constant 0 : index
    %0 = vector.load %arg1[%c0, %c0_0] : memref<512x72xbf16, #tpu.memory_space<vmem>>, vector<512x72xbf16>
    %c0_1 = arith.constant 0 : index
    %c0_2 = arith.constant 0 : index
    %1 = vector.load %arg2[%c0_1, %c0_2] : memref<72x128xbf16, #tpu.memory_space<vmem>>, vector<72x128xbf16>
    %cst = arith.constant dense<0.000000e+00> : vector<512x128xf32>
    %2 = tpu.matmul %0, %1, %cst {dimension_numbers = #tpu.dot_dimension_numbers<[1], [0], [0], [1], [0, 0, 1, 1], [], []>} : vector<512x72xbf16>, vector<72x128xbf16>, vector<512x128xf32> -> vector<512x128xf32>
    %c0_3 = arith.constant 0 : index
    %c0_4 = arith.constant 0 : index
    %3 = vector.load %arg3[%c0_3, %c0_4] : memref<1x128xf32, #tpu.memory_space<vmem>>, vector<1x128xf32>
    %4 = vector.broadcast %3 : vector<1x128xf32> to vector<512x128xf32>
    %5 = arith.addf %2, %4 : vector<512x128xf32>
    %cst_5 = arith.constant 0.000000e+00 : f32
    %6 = vector.broadcast %cst_5 : f32 to vector<512x128xf32>
    %7 = arith.maximumf %5, %6 : vector<512x128xf32>
    %c0_6 = arith.constant 0 : index
    %c0_7 = arith.constant 0 : index
    %8 = vector.load %arg4[%c0_6, %c0_7] : memref<512x128xf32, #tpu.memory_space<vmem>>, vector<512x128xf32>
    tpu.vector_store %arg4[%c0_6, %c0_7], %7 {strides = array<i32>} : memref<512x128xf32, #tpu.memory_space<vmem>>, vector<512x128xf32>,
    return
  }
  func.func @transform_0(%arg0: i32) -> (i32, i32) {
    %c0_i32 = arith.constant 0 : i32
    %c0_i32_0 = arith.constant 0 : i32
    return %arg0, %c0_i32 : i32, i32
  }
  func.func @transform_1(%arg0: i32) -> (i32, i32) {
    %c0_i32 = arith.constant 0 : i32
    %c0_i32_0 = arith.constant 0 : i32
    %c0_i32_1 = arith.constant 0 : i32
    return %c0_i32, %c0_i32_0 : i32, i32
  }
  func.func @transform_2(%arg0: i32) -> (i32, i32) {
    %c0_i32 = arith.constant 0 : i32
    %c0_i32_0 = arith.constant 0 : i32
    %c0_i32_1 = arith.constant 0 : i32
    return %c0_i32, %c0_i32_0 : i32, i32
  }
  func.func @transform_3(%arg0: i32) -> (i32, i32) {
    %c0_i32 = arith.constant 0 : i32
    %c0_i32_0 = arith.constant 0 : i32
    return %arg0, %c0_i32 : i32, i32
  }
}

</mosaic_0001>

<llo_original>
// kernel: tpu_custom_call.1
$region0: #{tpu_custom_call.1}
  #allocation0 [shape = 'u32[]', space=smem, size = 0x4, offset = 0x4, fixed_abs, tag = 'smem constant byte address 0x4 - core index']
  #allocation1 [shape = 'u32[144,128]{1,0:T(1,128)}', space=vmem, size = 0x12000, scoped, tag = 'internal scratch']
  %s0 = inlined_call_operand.vmem [shape: bf16[768,72], index: 0, kind: input, shape index: {}]
  %s1 = inlined_call_operand.vmem [shape: bf16[72,128], index: 1, kind: input, shape index: {}]
  %s2 = inlined_call_operand.vmem [shape: f32[1,128], index: 2, kind: input, shape index: {}]
  %s3 = inlined_call_operand.hbm [shape: f32[768,128], index: 3, kind: output, shape index: {}]
  %s4 = sld [smem:[#allocation0]]
  $region45: #{tpu_custom_call.1} parent=0
    _
  %s6 = ssub.s32 1, %s4
  %s7 = scalar_select 0, %s6, %s4
  $region1: #{tpu_custom_call.1} parent=0
    #allocation2 [shape = 'u8[524288]{0}', space=vmem, size = 0x80000, scoped, tag = 'output window, operand 0']
    #allocation3 [shape = 's32[2]{0}', space=sflag, size = 0x8, scoped, tag = 'scoped memory for tpu_custom_call.1']
    %8 = vsyncpa [#allocation3], 0
    %s9 = scalar_lea.sflag [#allocation3], 1
    %10 = vsyncpa %s9, 0
    loop: start=0, step=1, limit=4
    $region2: #{tpu_custom_call.1} parent=1 // loop_pre_header
      _
    $region3: #{tpu_custom_call.1} parent=1 // loop_header
      %s12 = sphi 0, %s16
      %p13 = scmp.ge.s32.totalorder %s12, 4
      %s22 = sphi 0, %s24
      %s25 = sphi 0, %s22
      %s26 = sphi 0, %s25
      %s42 = sphi 0, %s26
      %s46 = sphi 0, %s46
      %s48 = sphi 0, %s46
      %s49 = sphi 0, %s48
      %s63 = sphi 0, %s49
      %s67 = sphi 0, %s67
      %s69 = sphi 0, %s67
      %s70 = sphi 0, %s69
      %s84 = sphi 0, %s70
      %s90 = sphi 0, %s92
      %s93 = sphi 0, %s90
      %s94 = sphi 0, %s93
      %s110 = sphi 0, %s94
    $region4: #{tpu_custom_call.1} parent=1 // loop_header_branch
      %15 = sbr.rel (%p13) target = $region8
    $region5: #{tpu_custom_call.1} parent=1 // loop_body
      %s17 = ssub.s32 %s12, 1
      %s18 = ssub.s32 %s12, 2
      %s19 = sadd.s32 %s12, 1
      %s20 = ssub.s32 %s12, %s19
      %p21 = scmp.eq.s32.totalorder %s20, 0
      %s23 = sadd.s32 %s22, 1
      %s24 = scalar_select %p21, %s22, %s23
      %p27 = pneg %p21
      %p28 = scmp.eq.s32.totalorder %s12, 1
      %p29 = por %p27, %p28
      %p30 = scmp.ne.s32.totalorder %s22, %s25
      %p31 = scmp.eq.s32.totalorder %s12, 0
      %p32 = por %p30, %p31
      %p33 = scmp.ne.s32.totalorder %s22, %s25
      %p34 = scmp.eq.s32.totalorder %s17, 1
      %p35 = por %p33, %p34
      %p36 = scmp.ne.s32.totalorder %s25, %s26
      %p37 = scmp.eq.s32.totalorder %s17, 0
      %p38 = por %p36, %p37
      %p39 = scmp.ne.s32.totalorder %s25, %s26
      %p40 = scmp.eq.s32.totalorder %s18, 1
      %p41 = por %p39, %p40
      %p43 = scmp.ne.s32.totalorder %s26, %s42
      %p44 = scmp.eq.s32.totalorder %s18, 0
      %p45 = por %p43, %p44
      %s47 = sadd.s32 %s46, 1
      %p50 = scmp.eq.s32.totalorder %s12, 1
      %p51 = scmp.ne.s32.totalorder %s46, %s48
      %p52 = scmp.eq.s32.totalorder %s12, 0
      %p53 = por %p51, %p52
      %p54 = scmp.ne.s32.totalorder %s46, %s48
      %p55 = scmp.eq.s32.totalorder %s17, 1
      %p56 = por %p54, %p55
      %p57 = scmp.ne.s32.totalorder %s48, %s49
      %p58 = scmp.eq.s32.totalorder %s17, 0
      %p59 = por %p57, %p58
      %p60 = scmp.ne.s32.totalorder %s48, %s49
      %p61 = scmp.eq.s32.totalorder %s18, 1
      %p62 = por %p60, %p61
      %p64 = scmp.ne.s32.totalorder %s49, %s63
      %p65 = scmp.eq.s32.totalorder %s18, 0
      %p66 = por %p64, %p65
      %s68 = sadd.s32 %s67, 1
      %p71 = scmp.eq.s32.totalorder %s12, 1
      %p72 = scmp.ne.s32.totalorder %s67, %s69
      %p73 = scmp.eq.s32.totalorder %s12, 0
      %p74 = por %p72, %p73
      %p75 = scmp.ne.s32.totalorder %s67, %s69
      %p76 = scmp.eq.s32.totalorder %s17, 1
      %p77 = por %p75, %p76
      %p78 = scmp.ne.s32.totalorder %s69, %s70
      %p79 = scmp.eq.s32.totalorder %s17, 0
      %p80 = por %p78, %p79
      %p81 = scmp.ne.s32.totalorder %s69, %s70
      %p82 = scmp.eq.s32.totalorder %s18, 1
      %p83 = por %p81, %p82
      %p85 = scmp.ne.s32.totalorder %s70, %s84
      %p86 = scmp.eq.s32.totalorder %s18, 0
      %p87 = por %p85, %p86
      %s88 = ssub.s32 %s12, %s19
      %p89 = scmp.eq.s32.totalorder %s88, 0
      %s91 = sadd.s32 %s90, 1
      %s92 = scalar_select %p89, %s90, %s91
      %p95 = pneg %p89
      %p96 = scmp.eq.s32.totalorder %s12, 1
      %p97 = por %p95, %p96
      %p98 = scmp.ne.s32.totalorder %s90, %s93
      %p99 = scmp.eq.s32.totalorder %s12, 0
      %p100 = por %p98, %p99
      %p101 = scmp.ne.s32.totalorder %s90, %s93
      %p102 = scmp.eq.s32.totalorder %s17, 1
      %p103 = por %p101, %p102
      %p104 = scmp.ne.s32.totalorder %s93, %s94
      %p105 = scmp.eq.s32.totalorder %s17, 0
      %p106 = por %p104, %p105
      %p107 = scmp.ne.s32.totalorder %s93, %s94
      %p108 = scmp.eq.s32.totalorder %s18, 1
      %p109 = por %p107, %p108
      %p111 = scmp.ne.s32.totalorder %s94, %s110
      %p112 = scmp.eq.s32.totalorder %s18, 0
      %p113 = por %p111, %p112
      %p114 = scmp.le.s32.totalorder 1, %s12
      %p115 = scmp.lt.s32.totalorder %s12, 3
      %p116 = pnand %p114, %p115
      %p117 = pneg %p116
      // Predicated region
      $region9: #{tpu_custom_call.1} parent=5 // pred_check
        _
      $region10: #{tpu_custom_call.1} parent=5 // pred_check_branch
        %119 = sbr.rel (%p116) target = $region12
      $region11: #{tpu_custom_call.1} parent=5 // pred_region
        %s120 = ssub.s32 %s12, 1
        // Predicated region
        $region13: #{tpu_custom_call.1} parent=11 // pred_check
          %p121 = pneg %p59
        $region14: #{tpu_custom_call.1} parent=11 // pred_check_branch
          %123 = sbr.rel (%p121) target = $region16
        $region15: #{tpu_custom_call.1} parent=11 // pred_region
          _
        $region16: #{tpu_custom_call.1} parent=11 // pred_fallthru
          _
        // Predicated region
        $region17: #{tpu_custom_call.1} parent=11 // pred_check
          %p124 = pneg %p80
        $region18: #{tpu_custom_call.1} parent=11 // pred_check_branch
          %126 = sbr.rel (%p124) target = $region20
        $region19: #{tpu_custom_call.1} parent=11 // pred_region
          _
        $region20: #{tpu_custom_call.1} parent=11 // pred_fallthru
          _
      $region12: #{tpu_custom_call.1} parent=5 // pred_fallthru
        _
      %p127 = scmp.lt.s32.totalorder %s12, 2
      // Predicated region
      $region21: #{tpu_custom_call.1} parent=5 // pred_check
        %p128 = pneg %p127
      $region22: #{tpu_custom_call.1} parent=5 // pred_check_branch
        %130 = sbr.rel (%p128) target = $region24
      $region23: #{tpu_custom_call.1} parent=5 // pred_region
        // Predicated region
        $region25: #{tpu_custom_call.1} parent=23 // pred_check
          %p131 = pneg %p32
        $region26: #{tpu_custom_call.1} parent=23 // pred_check_branch
          %133 = sbr.rel (%p131) target = $region28
        $region27: #{tpu_custom_call.1} parent=23 // pred_region
          %s134 = smul.u32 64, %s12
          %s135 = ssub.s32 96, %s134
          %p136 = scmp.lt.s32.totalorder %s135, 64
          %s137 = scalar_select %p136, %s135, 64
          %s138 = smul.u32 64, %s137
          %p139 = scmp.lt.s32.totalorder %s134, 95
          %s140 = scalar_select %p139, %s134, 95
          %s141 = smul.addr %s140, 4
          %s142 = scalar_lea.vmem %s0, %s141
          %s143 = smul.u32 64, %s12
          %s144 = ssub.s32 96, %s143
          %p145 = scmp.lt.s32.totalorder %s144, 64
          %s146 = scalar_select %p145, %s144, 64
          %s147 = smul.u32 64, %s146
        $region28: #{tpu_custom_call.1} parent=23 // pred_fallthru
          _
      $region24: #{tpu_custom_call.1} parent=5 // pred_fallthru
        _
      %p148 = scmp.le.s32.totalorder 1, %s12
      %p149 = scmp.lt.s32.totalorder %s12, 3
      %p150 = pnand %p148, %p149
      %p151 = pneg %p150
      // Predicated region
      $region29: #{tpu_custom_call.1} parent=5 // pred_check
        _
      $region30: #{tpu_custom_call.1} parent=5 // pred_check_branch
        %153 = sbr.rel (%p150) target = $region32
      $region31: #{tpu_custom_call.1} parent=5 // pred_region
        %s154 = ssub.s32 %s12, 1
        %s155 = smul.u32 64, %s17
        %s156 = ssub.s32 96, %s155
        %p157 = scmp.lt.s32.totalorder %s156, 64
        %s158 = scalar_select %p157, %s156, 64
        %s159 = smul.u32 64, %s158
        %p160 = scmp.lt.s32.totalorder %s155, 95
        %s161 = scalar_select %p160, %s155, 95
        %s162 = smul.addr %s161, 4
        %s163 = scalar_lea.vmem %s0, %s162
        %p164 = pneg %p38
        %p165 = pneg %p35
        %p166 = pneg %p59
        %p167 = pneg %p56
        %p168 = pneg %p80
        %p169 = pneg %p77
        %p170 = pneg %p106
        %p171 = pneg %p103
        %s172 = sand.u32 %s93, 1
        %s173 = scalar_lea.sflag [#allocation3], %s172
        %s174 = sand.u32 %s93, 1
        %s175 = smul.addr %s174, 512
        %s176 = scalar_lea.vmem [#allocation2], %s175
        %s177 = smul.u32 64, %s17
        %s178 = ssub.s32 96, %s177
        %p179 = scmp.lt.s32.totalorder %s178, 64
        %s180 = scalar_select %p179, %s178, 64
        %s181 = smul.u32 64, %s180
        %p182 = scmp.lt.s32.totalorder %s177, 95
        %s183 = scalar_select %p182, %s177, 95
        %s184 = smul.addr %s183, 4
        %s185 = scalar_lea.vmem %s0, %s184
        %s186 = smul.u32 64, %s17
        %s187 = ssub.s32 96, %s186
        %p188 = scmp.lt.s32.totalorder %s187, 64
        %s189 = scalar_select %p188, %s187, 64
        %s190 = smul.u32 64, %s189
        %s191 = smul.u32 64, %s17
        %s192 = ssub.s32 96, %s191
        %p193 = scmp.lt.s32.totalorder %s192, 64
        %s194 = scalar_select %p193, %s192, 64
        %s195 = smul.u32 128, %s194
        %v197 = vld [vmem:[%s185] sm:$0xf]
        %v198 = vld [vmem:[%s185 + $0x4] sm:$0xf]
        %v199 = vld [vmem:[%s185 + $0x8] sm:$0xf]
        %v200 = vld [vmem:[%s185 + $0xc] sm:$0xf]
        %v201 = vld [vmem:[%s185 + $0x10] sm:$0xf]
        %v202 = vld [vmem:[%s185 + $0x14] sm:$0xf]
        %v203 = vld [vmem:[%s185 + $0x18] sm:$0xf]
        %v204 = vld [vmem:[%s185 + $0x1c] sm:$0xf]
        %v205 = vld [vmem:[%s185 + $0x20] sm:$0xf]
        %v206 = vld [vmem:[%s185 + $0x24] sm:$0xf]
        %v207 = vld [vmem:[%s185 + $0x28] sm:$0xf]
        %v208 = vld [vmem:[%s185 + $0x2c] sm:$0xf]
        %v209 = vld [vmem:[%s185 + $0x30] sm:$0xf]
        %v210 = vld [vmem:[%s185 + $0x34] sm:$0xf]
        %v211 = vld [vmem:[%s185 + $0x38] sm:$0xf]
        %v212 = vld [vmem:[%s185 + $0x3c] sm:$0xf]
        %v213 = vld [vmem:[%s185 + $0x40] sm:$0xf]
        %v214 = vld [vmem:[%s185 + $0x44] sm:$0xf]
        %v215 = vld [vmem:[%s185 + $0x48] sm:$0xf]
        %v216 = vld [vmem:[%s185 + $0x4c] sm:$0xf]
        %v217 = vld [vmem:[%s185 + $0x50] sm:$0xf]
        %v218 = vld [vmem:[%s185 + $0x54] sm:$0xf]
        %v219 = vld [vmem:[%s185 + $0x58] sm:$0xf]
        %v220 = vld [vmem:[%s185 + $0x5c] sm:$0xf]
        %v221 = vld [vmem:[%s185 + $0x60] sm:$0xf]
        %v222 = vld [vmem:[%s185 + $0x64] sm:$0xf]
        %v223 = vld [vmem:[%s185 + $0x68] sm:$0xf]
        %v224 = vld [vmem:[%s185 + $0x6c] sm:$0xf]
        %v225 = vld [vmem:[%s185 + $0x70] sm:$0xf]
        %v226 = vld [vmem:[%s185 + $0x74] sm:$0xf]
        %v227 = vld [vmem:[%s185 + $0x78] sm:$0xf]
        %v228 = vld [vmem:[%s185 + $0x7c] sm:$0xf]
        %v229 = vld [vmem:[%s185 + $0x80] sm:$0xf]
        %v230 = vld [vmem:[%s185 + $0x84] sm:$0xf]
        %v231 = vld [vmem:[%s185 + $0x88] sm:$0xf]
        %v232 = vld [vmem:[%s185 + $0x8c] sm:$0xf]
        %v233 = vld [vmem:[%s185 + $0x90] sm:$0xf]
        %v234 = vld [vmem:[%s185 + $0x94] sm:$0xf]
        %v235 = vld [vmem:[%s185 + $0x98] sm:$0xf]
        %v236 = vld [vmem:[%s185 + $0x9c] sm:$0xf]
        %v237 = vld [vmem:[%s185 + $0xa0] sm:$0xf]
        %v238 = vld [vmem:[%s185 + $0xa4] sm:$0xf]
        %v239 = vld [vmem:[%s185 + $0xa8] sm:$0xf]
        %v240 = vld [vmem:[%s185 + $0xac] sm:$0xf]
        %v241 = vld [vmem:[%s185 + $0xb0] sm:$0xf]
        %v242 = vld [vmem:[%s185 + $0xb4] sm:$0xf]
        %v243 = vld [vmem:[%s185 + $0xb8] sm:$0xf]
        %v244 = vld [vmem:[%s185 + $0xbc] sm:$0xf]
        %v245 = vld [vmem:[%s185 + $0xc0] sm:$0xf]
        %v246 = vld [vmem:[%s185 + $0xc4] sm:$0xf]
        %v247 = vld [vmem:[%s185 + $0xc8] sm:$0xf]
        %v248 = vld [vmem:[%s185 + $0xcc] sm:$0xf]
        %v249 = vld [vmem:[%s185 + $0xd0] sm:$0xf]
        %v250 = vld [vmem:[%s185 + $0xd4] sm:$0xf]
        %v251 = vld [vmem:[%s185 + $0xd8] sm:$0xf]
        %v252 = vld [vmem:[%s185 + $0xdc] sm:$0xf]
        %v253 = vld [vmem:[%s185 + $0xe0] sm:$0xf]
        %v254 = vld [vmem:[%s185 + $0xe4] sm:$0xf]
        %v255 = vld [vmem:[%s185 + $0xe8] sm:$0xf]
        %v256 = vld [vmem:[%s185 + $0xec] sm:$0xf]
        %v257 = vld [vmem:[%s185 + $0xf0] sm:$0xf]
        %v258 = vld [vmem:[%s185 + $0xf4] sm:$0xf]
        %v259 = vld [vmem:[%s185 + $0xf8] sm:$0xf]
        %v260 = vld [vmem:[%s185 + $0xfc] sm:$0xf]
        %v261 = vld [vmem:[%s1] sm:$0xf]
        %v262 = vld [vmem:[%s1 + $0x4] sm:$0xf]
        %v263 = vld [vmem:[%s1 + $0x8] sm:$0xf]
        %v264 = vld [vmem:[%s1 + $0xc] sm:$0xf]
        %v265 = vld [vmem:[%s1 + $0x10] sm:$0xf]
        %v266 = vld [vmem:[%s1 + $0x14] sm:$0xf]
        %v267 = vld [vmem:[%s1 + $0x18] sm:$0xf]
        %v268 = vld [vmem:[%s1 + $0x1c] sm:$0xf]
        %v269 = vld [vmem:[%s1 + $0x20] sm:$0xf]
        %v270 = vld [vmem:[%s2] sm:$0x1]
        %v272 = vlaneseq
        %v273 = vshrl.u32 %v272, 7
        %v274 = vsub.s32 0, %v273
        %v275 = vrot.slane %v270, %v274
        %v341 = vunpack.c.l.b16 %v197
        %v342 = vunpack.c.l.b16 %v198
        %v343 = vunpack.c.l.b16 %v199
        %v344 = vunpack.c.l.b16 %v200
        %v345 = vunpack.c.l.b16 %v201
        %v346 = vunpack.c.l.b16 %v202
        %v347 = vunpack.c.l.b16 %v203
        %v348 = vunpack.c.l.b16 %v204
        %v349 = vunpack.c.l.b16 %v205
        %v350 = vunpack.c.l.b16 %v206
        %v351 = vunpack.c.l.b16 %v207
        %v352 = vunpack.c.l.b16 %v208
        %v353 = vunpack.c.l.b16 %v209
        %v354 = vunpack.c.l.b16 %v210
        %v355 = vunpack.c.l.b16 %v211
        %v356 = vunpack.c.l.b16 %v212
        %v357 = vunpack.c.l.b16 %v213
        %v358 = vunpack.c.l.b16 %v214
        %v359 = vunpack.c.l.b16 %v215
        %v360 = vunpack.c.l.b16 %v216
        %v361 = vunpack.c.l.b16 %v217
        %v362 = vunpack.c.l.b16 %v218
        %v363 = vunpack.c.l.b16 %v219
        %v364 = vunpack.c.l.b16 %v220
        %v365 = vunpack.c.l.b16 %v221
        %v366 = vunpack.c.l.b16 %v222
        %v367 = vunpack.c.l.b16 %v223
        %v368 = vunpack.c.l.b16 %v224
        %v369 = vunpack.c.l.b16 %v225
        %v370 = vunpack.c.l.b16 %v226
        %v371 = vunpack.c.l.b16 %v227
        %v372 = vunpack.c.l.b16 %v228
        %v373 = vunpack.c.l.b16 %v229
        %v374 = vunpack.c.l.b16 %v230
        %v375 = vunpack.c.l.b16 %v231
        %v376 = vunpack.c.l.b16 %v232
        %v377 = vunpack.c.l.b16 %v233
        %v378 = vunpack.c.l.b16 %v234
        %v379 = vunpack.c.l.b16 %v235
        %v380 = vunpack.c.l.b16 %v236
        %v381 = vunpack.c.l.b16 %v237
        %v382 = vunpack.c.l.b16 %v238
        %v383 = vunpack.c.l.b16 %v239
        %v384 = vunpack.c.l.b16 %v240
        %v385 = vunpack.c.l.b16 %v241
        %v386 = vunpack.c.l.b16 %v242
        %v387 = vunpack.c.l.b16 %v243
        %v388 = vunpack.c.l.b16 %v244
        %v389 = vunpack.c.l.b16 %v245
        %v390 = vunpack.c.l.b16 %v246
        %v391 = vunpack.c.l.b16 %v247
        %v392 = vunpack.c.l.b16 %v248
        %v393 = vunpack.c.l.b16 %v249
        %v394 = vunpack.c.l.b16 %v250
        %v395 = vunpack.c.l.b16 %v251
        %v396 = vunpack.c.l.b16 %v252
        %v397 = vunpack.c.l.b16 %v253
        %v398 = vunpack.c.l.b16 %v254
        %v399 = vunpack.c.l.b16 %v255
        %v400 = vunpack.c.l.b16 %v256
        %v401 = vunpack.c.l.b16 %v257
        %v402 = vunpack.c.l.b16 %v258
        %v403 = vunpack.c.l.b16 %v259
        %v404 = vunpack.c.l.b16 %v260
        %v405 = vpack.c.b16 %v342, %v341
        %v406 = vpack.c.b16 %v344, %v343
        %v407 = vpack.c.b16 %v346, %v345
        %v408 = vpack.c.b16 %v348, %v347
        %v409 = vpack.c.b16 %v350, %v349
        %v410 = vpack.c.b16 %v352, %v351
        %v411 = vpack.c.b16 %v354, %v353
        %v412 = vpack.c.b16 %v356, %v355
        %v413 = vpack.c.b16 %v358, %v357
        %v414 = vpack.c.b16 %v360, %v359
        %v415 = vpack.c.b16 %v362, %v361
        %v416 = vpack.c.b16 %v364, %v363
        %v417 = vpack.c.b16 %v366, %v365
        %v418 = vpack.c.b16 %v368, %v367
        %v419 = vpack.c.b16 %v370, %v369
        %v420 = vpack.c.b16 %v372, %v371
        %v421 = vpack.c.b16 %v374, %v373
        %v422 = vpack.c.b16 %v376, %v375
        %v423 = vpack.c.b16 %v378, %v377
        %v424 = vpack.c.b16 %v380, %v379
        %v425 = vpack.c.b16 %v382, %v381
        %v426 = vpack.c.b16 %v384, %v383
        %v427 = vpack.c.b16 %v386, %v385
        %v428 = vpack.c.b16 %v388, %v387
        %v429 = vpack.c.b16 %v390, %v389
        %v430 = vpack.c.b16 %v392, %v391
        %v431 = vpack.c.b16 %v394, %v393
        %v432 = vpack.c.b16 %v396, %v395
        %v433 = vpack.c.b16 %v398, %v397
        %v434 = vpack.c.b16 %v400, %v399
        %v435 = vpack.c.b16 %v402, %v401
        %v436 = vpack.c.b16 %v404, %v403
        %v446 = vunpack.c.l.b16 %v261
        %v447 = vunpack.c.l.b16 %v262
        %v448 = vunpack.c.l.b16 %v263
        %v449 = vunpack.c.l.b16 %v264
        %v450 = vunpack.c.l.b16 %v265
        %v451 = vunpack.c.l.b16 %v266
        %v452 = vunpack.c.l.b16 %v267
        %v453 = vunpack.c.l.b16 %v268
        %v454 = vunpack.c.l.b16 %v269
        %v455 = vpack.c.b16 %v447, %v446
        %v456 = vpack.c.b16 %v449, %v448
        %v457 = vpack.c.b16 %v451, %v450
        %v458 = vpack.c.b16 %v453, %v452
        %v459 = vpack.c.b16 %v454, %v454
        %vm464 = vcmask 588800
        %v466 = vsel %vm464, %v405, 0
        %v469 = vsel %vm464, %v406, 0
        %v472 = vsel %vm464, %v407, 0
        %v475 = vsel %vm464, %v408, 0
        %v478 = vsel %vm464, %v409, 0
        %v481 = vsel %vm464, %v410, 0
        %v484 = vsel %vm464, %v411, 0
        %v487 = vsel %vm464, %v412, 0
        %v490 = vsel %vm464, %v413, 0
        %v493 = vsel %vm464, %v414, 0
        %v496 = vsel %vm464, %v415, 0
        %v499 = vsel %vm464, %v416, 0
        %v502 = vsel %vm464, %v417, 0
        %v505 = vsel %vm464, %v418, 0
        %v508 = vsel %vm464, %v419, 0
        %v511 = vsel %vm464, %v420, 0
        %v514 = vsel %vm464, %v421, 0
        %v517 = vsel %vm464, %v422, 0
        %v520 = vsel %vm464, %v423, 0
        %v523 = vsel %vm464, %v424, 0
        %v526 = vsel %vm464, %v425, 0
        %v529 = vsel %vm464, %v426, 0
        %v532 = vsel %vm464, %v427, 0
        %v535 = vsel %vm464, %v428, 0
        %v538 = vsel %vm464, %v429, 0
        %v541 = vsel %vm464, %v430, 0
        %v544 = vsel %vm464, %v431, 0
        %v547 = vsel %vm464, %v432, 0
        %v550 = vsel %vm464, %v433, 0
        %v553 = vsel %vm464, %v434, 0
        %v556 = vsel %vm464, %v435, 0
        %v559 = vsel %vm464, %v436, 0
        %vm561 = vcmask 1043456
        %v563 = vsel %vm561, %v459, 0
        %565 = vmatprep.subr.bf16.mxu0 0
        %566 = vmatpush1.bf16.msra.mxu0 %v455
        %567 = vmatprep.subr.bf16.mxu0 0
        %568 = vmatpush1.bf16.msra.mxu0 %v456
        %569 = vmatprep.subr.bf16.mxu0 0
        %570 = vmatpush1.bf16.msra.mxu0 %v457
        %571 = vmatprep.subr.bf16.mxu0 0
        %572 = vmatpush1.bf16.msra.mxu0 %v458
        %573 = vmatprep.subr.bf16.mxu0 0
        %574 = vmatpush1.bf16.msra.mxu0 %v563
        %575 = vmatprep.subr.bf16.mxu0 0
        %576 = vmatpush1.bf16.msra.mxu0 0
        %577 = vmatprep.subr.bf16.mxu0 0
        %578 = vmatpush1.bf16.msra.mxu0 0
        %579 = vmatprep.subr.bf16.mxu0 0
        %580 = vmatpush1.bf16.msra.mxu0 0
        %581 = vmatprep.subr.bf16.mxu0 0
        %582 = vmatpush1.bf16.msra.mxu0 0
        %583 = vmatprep.subr.bf16.mxu0 0
        %584 = vmatpush1.bf16.msra.mxu0 0
        %585 = vmatprep.subr.bf16.mxu0 0
        %586 = vmatpush1.bf16.msra.mxu0 0
        %587 = vmatprep.subr.bf16.mxu0 0
        %588 = vmatpush1.bf16.msra.mxu0 0
        %589 = vmatprep.subr.bf16.mxu0 0
        %590 = vmatpush1.bf16.msra.mxu0 0
        %591 = vmatprep.subr.bf16.mxu0 0
        %592 = vmatpush1.bf16.msra.mxu0 0
        %593 = vmatprep.subr.bf16.mxu0 0
        %594 = vmatpush1.bf16.msra.mxu0 0
        %595 = vmatprep.subr.bf16.mxu0 0
        %596 = vmatpush1.bf16.msra.mxu0 0
        %597 = vmatprep.mubr.bf16.mxu0 0
        %598 = vmatmul.mubr.bf16.gmra.mrb[0].mxu0 %v466
        %v599 = vpop.f32.mrb[0].mxu0
        %v600 = vadd.f32 %v275, %v599
        %v601 = vpop.f32.mrb[0].mxu0
        %v602 = vpop.f32.mrb[0].mxu0
        %v603 = vadd.f32 %v275, %v602
        %v604 = vpop.f32.mrb[0].mxu0
        %605 = vmatprep.mubr.bf16.mxu0 0
        %606 = vmatmul.mubr.bf16.gmra.mrb[0].mxu0 %v469
        %v607 = vpop.f32.mrb[0].mxu0
        %v608 = vadd.f32 %v275, %v607
        %v609 = vpop.f32.mrb[0].mxu0
        %v610 = vpop.f32.mrb[0].mxu0
        %v611 = vadd.f32 %v275, %v610
        %v612 = vpop.f32.mrb[0].mxu0
        %613 = vmatprep.mubr.bf16.mxu0 0
        %614 = vmatmul.mubr.bf16.gmra.mrb[0].mxu0 %v472
        %v615 = vpop.f32.mrb[0].mxu0
        %v616 = vadd.f32 %v275, %v615
        %v617 = vpop.f32.mrb[0].mxu0
        %v618 = vpop.f32.mrb[0].mxu0
        %v619 = vadd.f32 %v275, %v618
        %v620 = vpop.f32.mrb[0].mxu0
        %621 = vmatprep.mubr.bf16.mxu0 0
        %622 = vmatmul.mubr.bf16.gmra.mrb[0].mxu0 %v475
        %v623 = vpop.f32.mrb[0].mxu0
        %v624 = vadd.f32 %v275, %v623
        %v625 = vpop.f32.mrb[0].mxu0
        %v626 = vpop.f32.mrb[0].mxu0
        %v627 = vadd.f32 %v275, %v626
        %v628 = vpop.f32.mrb[0].mxu0
        %629 = vmatprep.mubr.bf16.mxu0 0
        %630 = vmatmul.mubr.bf16.gmra.mrb[0].mxu0 %v478
        %v631 = vpop.f32.mrb[0].mxu0
        %v632 = vadd.f32 %v275, %v631
        %v633 = vpop.f32.mrb[0].mxu0
        %v634 = vpop.f32.mrb[0].mxu0
        %v635 = vadd.f32 %v275, %v634
        %v636 = vpop.f32.mrb[0].mxu0
        %637 = vmatprep.mubr.bf16.mxu0 0
        %638 = vmatmul.mubr.bf16.gmra.mrb[0].mxu0 %v481
        %v639 = vpop.f32.mrb[0].mxu0
        %v640 = vadd.f32 %v275, %v639
        %v641 = vpop.f32.mrb[0].mxu0
        %v642 = vpop.f32.mrb[0].mxu0
        %v643 = vadd.f32 %v275, %v642
        %v644 = vpop.f32.mrb[0].mxu0
        %645 = vmatprep.mubr.bf16.mxu0 0
        %646 = vmatmul.mubr.bf16.gmra.mrb[0].mxu0 %v484
        %v647 = vpop.f32.mrb[0].mxu0
        %v648 = vadd.f32 %v275, %v647
        %v649 = vpop.f32.mrb[0].mxu0
        %v650 = vpop.f32.mrb[0].mxu0
        %v651 = vadd.f32 %v275, %v650
        %v652 = vpop.f32.mrb[0].mxu0
        %653 = vmatprep.mubr.bf16.mxu0 0
        %654 = vmatmul.mubr.bf16.gmra.mrb[0].mxu0 %v487
        %v655 = vpop.f32.mrb[0].mxu0
        %v656 = vadd.f32 %v275, %v655
        %v657 = vpop.f32.mrb[0].mxu0
        %v658 = vpop.f32.mrb[0].mxu0
        %v659 = vadd.f32 %v275, %v658
        %v660 = vpop.f32.mrb[0].mxu0
        %661 = vmatprep.mubr.bf16.mxu0 0
        %662 = vmatmul.mubr.bf16.gmra.mrb[0].mxu0 %v490
        %v663 = vpop.f32.mrb[0].mxu0
        %v664 = vadd.f32 %v275, %v663
        %v665 = vpop.f32.mrb[0].mxu0
        %v666 = vpop.f32.mrb[0].mxu0
        %v667 = vadd.f32 %v275, %v666
        %v668 = vpop.f32.mrb[0].mxu0
        %669 = vmatprep.mubr.bf16.mxu0 0
        %670 = vmatmul.mubr.bf16.gmra.mrb[0].mxu0 %v493
        %v671 = vpop.f32.mrb[0].mxu0
        %v672 = vadd.f32 %v275, %v671
        %v673 = vpop.f32.mrb[0].mxu0
        %v674 = vpop.f32.mrb[0].mxu0
        %v675 = vadd.f32 %v275, %v674
        %v676 = vpop.f32.mrb[0].mxu0
        %677 = vmatprep.mubr.bf16.mxu0 0
        %678 = vmatmul.mubr.bf16.gmra.mrb[0].mxu0 %v496
        %v679 = vpop.f32.mrb[0].mxu0
        %v680 = vadd.f32 %v275, %v679
        %v681 = vpop.f32.mrb[0].mxu0
        %v682 = vpop.f32.mrb[0].mxu0
        %v683 = vadd.f32 %v275, %v682
        %v684 = vpop.f32.mrb[0].mxu0
        %685 = vmatprep.mubr.bf16.mxu0 0
        %686 = vmatmul.mubr.bf16.gmra.mrb[0].mxu0 %v499
        %v687 = vpop.f32.mrb[0].mxu0
        %v688 = vadd.f32 %v275, %v687
        %v689 = vpop.f32.mrb[0].mxu0
        %v690 = vpop.f32.mrb[0].mxu0
        %v691 = vadd.f32 %v275, %v690
        %v692 = vpop.f32.mrb[0].mxu0
        %693 = vmatprep.mubr.bf16.mxu0 0
        %694 = vmatmul.mubr.bf16.gmra.mrb[0].mxu0 %v502
        %v695 = vpop.f32.mrb[0].mxu0
        %v696 = vadd.f32 %v275, %v695
        %v697 = vpop.f32.mrb[0].mxu0
        %v698 = vpop.f32.mrb[0].mxu0
        %v699 = vadd.f32 %v275, %v698
        %v700 = vpop.f32.mrb[0].mxu0
        %701 = vmatprep.mubr.bf16.mxu0 0
        %702 = vmatmul.mubr.bf16.gmra.mrb[0].mxu0 %v505
        %v703 = vpop.f32.mrb[0].mxu0
        %v704 = vadd.f32 %v275, %v703
        %v705 = vpop.f32.mrb[0].mxu0
        %v706 = vpop.f32.mrb[0].mxu0
        %v707 = vadd.f32 %v275, %v706
        %v708 = vpop.f32.mrb[0].mxu0
        %709 = vmatprep.mubr.bf16.mxu0 0
        %710 = vmatmul.mubr.bf16.gmra.mrb[0].mxu0 %v508
        %v711 = vpop.f32.mrb[0].mxu0
        %v712 = vadd.f32 %v275, %v711
        %v713 = vpop.f32.mrb[0].mxu0
        %v714 = vpop.f32.mrb[0].mxu0
        %v715 = vadd.f32 %v275, %v714
        %v716 = vpop.f32.mrb[0].mxu0
        %717 = vmatprep.mubr.bf16.mxu0 0
        %718 = vmatmul.mubr.bf16.gmra.mrb[0].mxu0 %v511
        %v719 = vpop.f32.mrb[0].mxu0
        %v720 = vadd.f32 %v275, %v719
        %v721 = vpop.f32.mrb[0].mxu0
        %v722 = vpop.f32.mrb[0].mxu0
        %v723 = vadd.f32 %v275, %v722
        %v724 = vpop.f32.mrb[0].mxu0
        %725 = vmatprep.mubr.bf16.mxu0 0
        %726 = vmatmul.mubr.bf16.gmra.mrb[0].mxu0 %v514
        %v727 = vpop.f32.mrb[0].mxu0
        %v728 = vadd.f32 %v275, %v727
        %v729 = vpop.f32.mrb[0].mxu0
        %v730 = vpop.f32.mrb[0].mxu0
        %v731 = vadd.f32 %v275, %v730
        %v732 = vpop.f32.mrb[0].mxu0
        %733 = vmatprep.mubr.bf16.mxu0 0
        %734 = vmatmul.mubr.bf16.gmra.mrb[0].mxu0 %v517
        %v735 = vpop.f32.mrb[0].mxu0
        %v736 = vadd.f32 %v275, %v735
        %v737 = vpop.f32.mrb[0].mxu0
        %v738 = vpop.f32.mrb[0].mxu0
        %v739 = vadd.f32 %v275, %v738
        %v740 = vpop.f32.mrb[0].mxu0
        %741 = vmatprep.mubr.bf16.mxu0 0
        %742 = vmatmul.mubr.bf16.gmra.mrb[0].mxu0 %v520
        %v743 = vpop.f32.mrb[0].mxu0
        %v744 = vadd.f32 %v275, %v743
        %v745 = vpop.f32.mrb[0].mxu0
        %v746 = vpop.f32.mrb[0].mxu0
        %v747 = vadd.f32 %v275, %v746
        %v748 = vpop.f32.mrb[0].mxu0
        %749 = vmatprep.mubr.bf16.mxu0 0
        %750 = vmatmul.mubr.bf16.gmra.mrb[0].mxu0 %v523
        %v751 = vpop.f32.mrb[0].mxu0
        %v752 = vadd.f32 %v275, %v751
        %v753 = vpop.f32.mrb[0].mxu0
        %v754 = vpop.f32.mrb[0].mxu0
        %v755 = vadd.f32 %v275, %v754
        %v756 = vpop.f32.mrb[0].mxu0
        %757 = vmatprep.mubr.bf16.mxu0 0
        %758 = vmatmul.mubr.bf16.gmra.mrb[0].mxu0 %v526
        %v759 = vpop.f32.mrb[0].mxu0
        %v760 = vadd.f32 %v275, %v759
        %v761 = vpop.f32.mrb[0].mxu0
        %v762 = vpop.f32.mrb[0].mxu0
        %v763 = vadd.f32 %v275, %v762
        %v764 = vpop.f32.mrb[0].mxu0
        %765 = vmatprep.mubr.bf16.mxu0 0
        %766 = vmatmul.mubr.bf16.gmra.mrb[0].mxu0 %v529
        %v767 = vpop.f32.mrb[0].mxu0
        %v768 = vadd.f32 %v275, %v767
        %v769 = vpop.f32.mrb[0].mxu0
        %v770 = vpop.f32.mrb[0].mxu0
        %v771 = vadd.f32 %v275, %v770
        %v772 = vpop.f32.mrb[0].mxu0
        %773 = vmatprep.mubr.bf16.mxu0 0
        %774 = vmatmul.mubr.bf16.gmra.mrb[0].mxu0 %v532
        %v775 = vpop.f32.mrb[0].mxu0
        %v776 = vadd.f32 %v275, %v775
        %v777 = vpop.f32.mrb[0].mxu0
        %v778 = vpop.f32.mrb[0].mxu0
        %v779 = vadd.f32 %v275, %v778
        %v780 = vpop.f32.mrb[0].mxu0
        %781 = vmatprep.mubr.bf16.mxu0 0
        %782 = vmatmul.mubr.bf16.gmra.mrb[0].mxu0 %v535
        %v783 = vpop.f32.mrb[0].mxu0
        %v784 = vadd.f32 %v275, %v783
        %v785 = vpop.f32.mrb[0].mxu0
        %v786 = vpop.f32.mrb[0].mxu0
        %v787 = vadd.f32 %v275, %v786
        %v788 = vpop.f32.mrb[0].mxu0
        %789 = vmatprep.mubr.bf16.mxu0 0
        %790 = vmatmul.mubr.bf16.gmra.mrb[0].mxu0 %v538
        %v791 = vpop.f32.mrb[0].mxu0
        %v792 = vadd.f32 %v275, %v791
        %v793 = vpop.f32.mrb[0].mxu0
        %v794 = vpop.f32.mrb[0].mxu0
        %v795 = vadd.f32 %v275, %v794
        %v796 = vpop.f32.mrb[0].mxu0
        %797 = vmatprep.mubr.bf16.mxu0 0
        %798 = vmatmul.mubr.bf16.gmra.mrb[0].mxu0 %v541
        %v799 = vpop.f32.mrb[0].mxu0
        %v800 = vadd.f32 %v275, %v799
        %v801 = vpop.f32.mrb[0].mxu0
        %v802 = vpop.f32.mrb[0].mxu0
        %v803 = vadd.f32 %v275, %v802
        %v804 = vpop.f32.mrb[0].mxu0
        %805 = vmatprep.mubr.bf16.mxu0 0
        %806 = vmatmul.mubr.bf16.gmra.mrb[0].mxu0 %v544
        %v807 = vpop.f32.mrb[0].mxu0
        %v808 = vadd.f32 %v275, %v807
        %v809 = vpop.f32.mrb[0].mxu0
        %v810 = vpop.f32.mrb[0].mxu0
        %v811 = vadd.f32 %v275, %v810
        %v812 = vpop.f32.mrb[0].mxu0
        %813 = vmatprep.mubr.bf16.mxu0 0
        %814 = vmatmul.mubr.bf16.gmra.mrb[0].mxu0 %v547
        %v815 = vpop.f32.mrb[0].mxu0
        %v816 = vadd.f32 %v275, %v815
        %v817 = vpop.f32.mrb[0].mxu0
        %v818 = vpop.f32.mrb[0].mxu0
        %v819 = vadd.f32 %v275, %v818
        %v820 = vpop.f32.mrb[0].mxu0
        %821 = vmatprep.mubr.bf16.mxu0 0
        %822 = vmatmul.mubr.bf16.gmra.mrb[0].mxu0 %v550
        %v823 = vpop.f32.mrb[0].mxu0
        %v824 = vadd.f32 %v275, %v823
        %v825 = vpop.f32.mrb[0].mxu0
        %v826 = vpop.f32.mrb[0].mxu0
        %v827 = vadd.f32 %v275, %v826
        %v828 = vpop.f32.mrb[0].mxu0
        %829 = vmatprep.mubr.bf16.mxu0 0
        %830 = vmatmul.mubr.bf16.gmra.mrb[0].mxu0 %v553
        %v831 = vpop.f32.mrb[0].mxu0
        %v832 = vadd.f32 %v275, %v831
        %v833 = vpop.f32.mrb[0].mxu0
        %v834 = vpop.f32.mrb[0].mxu0
        %v835 = vadd.f32 %v275, %v834
        %v836 = vpop.f32.mrb[0].mxu0
        %837 = vmatprep.mubr.bf16.mxu0 0
        %838 = vmatmul.mubr.bf16.gmra.mrb[0].mxu0 %v556
        %v839 = vpop.f32.mrb[0].mxu0
        %v840 = vadd.f32 %v275, %v839
        %v841 = vpop.f32.mrb[0].mxu0
        %v842 = vpop.f32.mrb[0].mxu0
        %v843 = vadd.f32 %v275, %v842
        %v844 = vpop.f32.mrb[0].mxu0
        %845 = vmatprep.mubr.bf16.mxu0 0
        %846 = vmatmul.mubr.bf16.gmra.mrb[0].mxu0 %v559
        %v847 = vpop.f32.mrb[0].mxu0
        %v848 = vadd.f32 %v275, %v847
        %v849 = vpop.f32.mrb[0].mxu0
        %v850 = vpop.f32.mrb[0].mxu0
        %v851 = vadd.f32 %v275, %v850
        %v852 = vpop.f32.mrb[0].mxu0
        %853 = vdwg.mxu0
        %v854 = vmax.f32 %v600, 0.0
        %v855 = vmax.f32 %v603, 0.0
        %v856 = vmax.f32 %v608, 0.0
        %v857 = vmax.f32 %v611, 0.0
        %v858 = vmax.f32 %v616, 0.0
        %v859 = vmax.f32 %v619, 0.0
        %v860 = vmax.f32 %v624, 0.0
        %v861 = vmax.f32 %v627, 0.0
        %v862 = vmax.f32 %v632, 0.0
        %v863 = vmax.f32 %v635, 0.0
        %v864 = vmax.f32 %v640, 0.0
        %v865 = vmax.f32 %v643, 0.0
        %v866 = vmax.f32 %v648, 0.0
        %v867 = vmax.f32 %v651, 0.0
        %v868 = vmax.f32 %v656, 0.0
        %v869 = vmax.f32 %v659, 0.0
        %v870 = vmax.f32 %v664, 0.0
        %v871 = vmax.f32 %v667, 0.0
        %v872 = vmax.f32 %v672, 0.0
        %v873 = vmax.f32 %v675, 0.0
        %v874 = vmax.f32 %v680, 0.0
        %v875 = vmax.f32 %v683, 0.0
        %v876 = vmax.f32 %v688, 0.0
        %v877 = vmax.f32 %v691, 0.0
        %v878 = vmax.f32 %v696, 0.0
        %v879 = vmax.f32 %v699, 0.0
        %v880 = vmax.f32 %v704, 0.0
        %v881 = vmax.f32 %v707, 0.0
        %v882 = vmax.f32 %v712, 0.0
        %v883 = vmax.f32 %v715, 0.0
        %v884 = vmax.f32 %v720, 0.0
        %v885 = vmax.f32 %v723, 0.0
        %v886 = vmax.f32 %v728, 0.0
        %v887 = vmax.f32 %v731, 0.0
        %v888 = vmax.f32 %v736, 0.0
        %v889 = vmax.f32 %v739, 0.0
        %v890 = vmax.f32 %v744, 0.0
        %v891 = vmax.f32 %v747, 0.0
        %v892 = vmax.f32 %v752, 0.0
        %v893 = vmax.f32 %v755, 0.0
        %v894 = vmax.f32 %v760, 0.0
        %v895 = vmax.f32 %v763, 0.0
        %v896 = vmax.f32 %v768, 0.0
        %v897 = vmax.f32 %v771, 0.0
        %v898 = vmax.f32 %v776, 0.0
        %v899 = vmax.f32 %v779, 0.0
        %v900 = vmax.f32 %v784, 0.0
        %v901 = vmax.f32 %v787, 0.0
        %v902 = vmax.f32 %v792, 0.0
        %v903 = vmax.f32 %v795, 0.0
        %v904 = vmax.f32 %v800, 0.0
        %v905 = vmax.f32 %v803, 0.0
        %v906 = vmax.f32 %v808, 0.0
        %v907 = vmax.f32 %v811, 0.0
        %v908 = vmax.f32 %v816, 0.0
        %v909 = vmax.f32 %v819, 0.0
        %v910 = vmax.f32 %v824, 0.0
        %v911 = vmax.f32 %v827, 0.0
        %v912 = vmax.f32 %v832, 0.0
        %v913 = vmax.f32 %v835, 0.0
        %v914 = vmax.f32 %v840, 0.0
        %v915 = vmax.f32 %v843, 0.0
        %v916 = vmax.f32 %v848, 0.0
        %v917 = vmax.f32 %v851, 0.0
        %918 = vst [vmem:[%s176] sm:$0xff] %v854
        %919 = vst [vmem:[%s176 + $0x8] sm:$0xff] %v855
        %920 = vst [vmem:[%s176 + $0x10] sm:$0xff] %v856
        %921 = vst [vmem:[%s176 + $0x18] sm:$0xff] %v857
        %922 = vst [vmem:[%s176 + $0x20] sm:$0xff] %v858
        %923 = vst [vmem:[%s176 + $0x28] sm:$0xff] %v859
        %924 = vst [vmem:[%s176 + $0x30] sm:$0xff] %v860
        %925 = vst [vmem:[%s176 + $0x38] sm:$0xff] %v861
        %926 = vst [vmem:[%s176 + $0x40] sm:$0xff] %v862
        %927 = vst [vmem:[%s176 + $0x48] sm:$0xff] %v863
        %928 = vst [vmem:[%s176 + $0x50] sm:$0xff] %v864
        %929 = vst [vmem:[%s176 + $0x58] sm:$0xff] %v865
        %930 = vst [vmem:[%s176 + $0x60] sm:$0xff] %v866
        %931 = vst [vmem:[%s176 + $0x68] sm:$0xff] %v867
        %932 = vst [vmem:[%s176 + $0x70] sm:$0xff] %v868
        %933 = vst [vmem:[%s176 + $0x78] sm:$0xff] %v869
        %934 = vst [vmem:[%s176 + $0x80] sm:$0xff] %v870
        %935 = vst [vmem:[%s176 + $0x88] sm:$0xff] %v871
        %936 = vst [vmem:[%s176 + $0x90] sm:$0xff] %v872
        %937 = vst [vmem:[%s176 + $0x98] sm:$0xff] %v873
        %938 = vst [vmem:[%s176 + $0xa0] sm:$0xff] %v874
        %939 = vst [vmem:[%s176 + $0xa8] sm:$0xff] %v875
        %940 = vst [vmem:[%s176 + $0xb0] sm:$0xff] %v876
        %941 = vst [vmem:[%s176 + $0xb8] sm:$0xff] %v877
        %942 = vst [vmem:[%s176 + $0xc0] sm:$0xff] %v878
        %943 = vst [vmem:[%s176 + $0xc8] sm:$0xff] %v879
        %944 = vst [vmem:[%s176 + $0xd0] sm:$0xff] %v880
        %945 = vst [vmem:[%s176 + $0xd8] sm:$0xff] %v881
        %946 = vst [vmem:[%s176 + $0xe0] sm:$0xff] %v882
        %947 = vst [vmem:[%s176 + $0xe8] sm:$0xff] %v883
        %948 = vst [vmem:[%s176 + $0xf0] sm:$0xff] %v884
        %949 = vst [vmem:[%s176 + $0xf8] sm:$0xff] %v885
        %950 = vst [vmem:[%s176 + $0x100] sm:$0xff] %v886
        %951 = vst [vmem:[%s176 + $0x108] sm:$0xff] %v887
        %952 = vst [vmem:[%s176 + $0x110] sm:$0xff] %v888
        %953 = vst [vmem:[%s176 + $0x118] sm:$0xff] %v889
        %954 = vst [vmem:[%s176 + $0x120] sm:$0xff] %v890
        %955 = vst [vmem:[%s176 + $0x128] sm:$0xff] %v891
        %956 = vst [vmem:[%s176 + $0x130] sm:$0xff] %v892
        %957 = vst [vmem:[%s176 + $0x138] sm:$0xff] %v893
        %958 = vst [vmem:[%s176 + $0x140] sm:$0xff] %v894
        %959 = vst [vmem:[%s176 + $0x148] sm:$0xff] %v895
        %960 = vst [vmem:[%s176 + $0x150] sm:$0xff] %v896
        %961 = vst [vmem:[%s176 + $0x158] sm:$0xff] %v897
        %962 = vst [vmem:[%s176 + $0x160] sm:$0xff] %v898
        %963 = vst [vmem:[%s176 + $0x168] sm:$0xff] %v899
        %964 = vst [vmem:[%s176 + $0x170] sm:$0xff] %v900
        %965 = vst [vmem:[%s176 + $0x178] sm:$0xff] %v901
        %966 = vst [vmem:[%s176 + $0x180] sm:$0xff] %v902
        %967 = vst [vmem:[%s176 + $0x188] sm:$0xff] %v903
        %968 = vst [vmem:[%s176 + $0x190] sm:$0xff] %v904
        %969 = vst [vmem:[%s176 + $0x198] sm:$0xff] %v905
        %970 = vst [vmem:[%s176 + $0x1a0] sm:$0xff] %v906
        %971 = vst [vmem:[%s176 + $0x1a8] sm:$0xff] %v907
        %972 = vst [vmem:[%s176 + $0x1b0] sm:$0xff] %v908
        %973 = vst [vmem:[%s176 + $0x1b8] sm:$0xff] %v909
        %974 = vst [vmem:[%s176 + $0x1c0] sm:$0xff] %v910
        %975 = vst [vmem:[%s176 + $0x1c8] sm:$0xff] %v911
        %976 = vst [vmem:[%s176 + $0x1d0] sm:$0xff] %v912
        %977 = vst [vmem:[%s176 + $0x1d8] sm:$0xff] %v913
        %978 = vst [vmem:[%s176 + $0x1e0] sm:$0xff] %v914
        %979 = vst [vmem:[%s176 + $0x1e8] sm:$0xff] %v915
        %980 = vst [vmem:[%s176 + $0x1f0] sm:$0xff] %v916
        %981 = vst [vmem:[%s176 + $0x1f8] sm:$0xff] %v917
        %s982 = sand.u32 %s93, 1
        %s983 = scalar_lea.sflag [#allocation3], %s982
        %s984 = sand.u32 %s93, 1
        %s985 = smul.addr %s984, 512
        %s986 = scalar_lea.vmem [#allocation2], %s985
        // Predicated region
        $region33: #{tpu_custom_call.1} parent=31 // pred_check
          %p987 = pneg %p103
        $region34: #{tpu_custom_call.1} parent=31 // pred_check_branch
          %989 = sbr.rel (%p987) target = $region36
        $region35: #{tpu_custom_call.1} parent=31 // pred_region
          %s990 = smul.u32 64, %s17
          %s991 = ssub.s32 96, %s990
          %p992 = scmp.lt.s32.totalorder %s991, 64
          %s993 = scalar_select %p992, %s991, 64
          %s994 = smul.u32 128, %s993
          %s996 = ssub.s32 8192, %s994
          %997 = vsyncadd %s983, %s996
          %p998 = scmp.ne.s32.totalorder 0, %s994
          %s999 = smul.addr %s990, 128
          %s1000 = scalar_lea.hbm %s3, %s999
          %s1001 = smul.u32 8, %s993
          %s1002 = sshll.u32 %s986, 4
          %s1003 = int_to_ptr.vmem [resolvable:$true] %s1002
          %s1004 = sshll.u32 %s1001, 4
          %1008 = dma.vmem_to_hbm [thread:$0]  (%p998), %s1003, %s1004, %s1000, %s983, 128, 128, 8
        $region36: #{tpu_custom_call.1} parent=31 // pred_fallthru
          _
      $region32: #{tpu_custom_call.1} parent=5 // pred_fallthru
        _
      %p1009 = scmp.le.s32.totalorder 2, %s12
      // Predicated region
      $region37: #{tpu_custom_call.1} parent=5 // pred_check
        %p1010 = pneg %p1009
      $region38: #{tpu_custom_call.1} parent=5 // pred_check_branch
        %1012 = sbr.rel (%p1010) target = $region40
      $region39: #{tpu_custom_call.1} parent=5 // pred_region
        %s1013 = ssub.s32 %s12, 2
        // Predicated region
        $region41: #{tpu_custom_call.1} parent=39 // pred_check
          %p1014 = pneg %p109
        $region42: #{tpu_custom_call.1} parent=39 // pred_check_branch
          %1016 = sbr.rel (%p1014) target = $region44
        $region43: #{tpu_custom_call.1} parent=39 // pred_region
          %s1017 = sand.u32 %s94, 1
          %s1018 = scalar_lea.sflag [#allocation3], %s1017
          %s1019 = sand.u32 %s94, 1
          %s1020 = smul.addr %s1019, 512
          %s1021 = scalar_lea.vmem [#allocation2], %s1020
          %1022 = dma.done %s1018, 8192
        $region44: #{tpu_custom_call.1} parent=39 // pred_fallthru
          _
      $region40: #{tpu_custom_call.1} parent=5 // pred_fallthru
        _
    $region6: #{tpu_custom_call.1} parent=1 // loop_footer
      %s16 = sadd.s32 1, %s12
    $region7: #{tpu_custom_call.1} parent=1 // loop_footer_branch
      %11 = sbr.rel target = $region3
    $region8: #{tpu_custom_call.1} parent=1 // loop_exit
      _
    %1023 = vsyncpa [#allocation3], 1
    %s1024 = scalar_lea.sflag [#allocation3], 1
    %1025 = vsyncpa %s1024, 1

</llo_original>
